<compile_context>
chip_gen: v6e
topology: v6e:2x2x1
jax: 0.10.0
libtpu: 0.0.40
codegen_flags: <defaults>
</compile_context>

<pallas_src>
import functools

import jax
import jax.numpy as jnp
from jax import lax
from jax.experimental import pallas as pl
from jax.experimental.pallas import tpu as pltpu

_MiB = 1024 * 1024


@functools.lru_cache(maxsize=None)
def _vmem_policy():
    """Returns (tiling budget bytes, vmem_limit ceiling bytes) per generation."""
    try:
        cap = int(pltpu.get_tpu_info().vmem_capacity_bytes)
    except Exception:
        cap = 64 * _MiB  # conservative fallback: assume v7x-sized VMEM
    if cap >= 100 * _MiB:  # v5e / v6e: 128 MiB physical VMEM
        return 96 * _MiB, 110 * _MiB
    # v7x: 64 MiB physical per TensorCore -> leave headroom for Mosaic scratch.
    return 40 * _MiB, 56 * _MiB


# ----------------------------- kernels ------------------------------------


def _ae_kernel_f32(x_ref, we_ref, wd_ref, xrec_ref, h_ref, res_ref):
    """f32-output path.  The x_rec output block has a constant block index over
    the k (hidden) grid axis, so it stays VMEM-resident and is used directly as
    the f32 decoder accumulator (no scratch buffer, no final copy/cast).

    x_ref    : (tb, dim)       input rows (block constant over k)
    we_ref   : (dim, th)       W_enc^T block  (MXU-native (K, N))
    wd_ref   : (th, dim)       W_dec^T block  (MXU-native (K, N))
    xrec_ref : (tb, dim) f32   reconstruction / decoder accumulator
    h_ref    : (tb, th)        code block (written every k step)
    res_ref  : (tb, dim)       residual x - x_ (written on the last k step)
    """
    k = pl.program_id(1)
    x = x_ref[...]

    # Encoder block: (tb, dim) @ (dim, th) -> (tb, th); standard (M,K)@(K,N).
    h_blk = lax.dot_general(
        x.astype(we_ref.dtype), we_ref[...],
        dimension_numbers=(((1,), (0,)), ((), ())),
        preferred_element_type=jnp.float32,
    )
    h_ref[...] = h_blk.astype(h_ref.dtype)

    # Decoder partial sum for this hidden block: (tb, th) @ (th, dim).
    partial = lax.dot_general(
        h_blk.astype(wd_ref.dtype), wd_ref[...],
        dimension_numbers=(((1,), (0,)), ((), ())),
        preferred_element_type=jnp.float32,
    )

    @pl.when(k == 0)
    def _():
        xrec_ref[...] = partial          # first partial written directly (no memset)

    @pl.when(k != 0)
    def _():
        xrec_ref[...] += partial

    @pl.when(k == pl.num_programs(1) - 1)
    def _():
        res_ref[...] = x.astype(jnp.float32) - xrec_ref[...]


def _ae_kernel_acc(x_ref, we_ref, wd_ref, xrec_ref, h_ref, res_ref, acc_ref):
    """Sub-f32 output path: accumulate in a dedicated f32 VMEM scratch, cast on
    the last k step."""
    k = pl.program_id(1)
    x = x_ref[...]

    h_blk = lax.dot_general(
        x.astype(we_ref.dtype), we_ref[...],
        dimension_numbers=(((1,), (0,)), ((), ())),
        preferred_element_type=jnp.float32,
    )
    h_ref[...] = h_blk.astype(h_ref.dtype)

    partial = lax.dot_general(
        h_blk.astype(wd_ref.dtype), wd_ref[...],
        dimension_numbers=(((1,), (0,)), ((), ())),
        preferred_element_type=jnp.float32,
    )

    @pl.when(k == 0)
    def _():
        acc_ref[...] = partial

    @pl.when(k != 0)
    def _():
        acc_ref[...] += partial

    @pl.when(k == pl.num_programs(1) - 1)
    def _():
        x_rec = acc_ref[...]
        xrec_ref[...] = x_rec.astype(xrec_ref.dtype)
        res_ref[...] = (x.astype(jnp.float32) - x_rec).astype(res_ref.dtype)


# --------------------------- tiling policy ---------------------------------


def _vmem_estimate(tb, th, dim, x_itemsize, w_itemsize, out_itemsize, needs_scratch):
    """Per-step VMEM footprint (double-buffered streams + scratch) with headroom
    for compiler temporaries."""
    total = 0
    total += 2 * tb * dim * x_itemsize                # x tile
    total += 2 * dim * th * w_itemsize                # W_enc^T block
    total += 2 * th * dim * w_itemsize                # W_dec^T block
    total += 2 * tb * th * out_itemsize               # h block
    total += 2 * tb * dim * max(out_itemsize, 4)      # x_rec block (f32 accumulator)
    total += 2 * tb * dim * out_itemsize              # residual block
    if needs_scratch:
        total += tb * dim * 4                         # f32 accumulator scratch
    return int(total * 1.15) + 2 * _MiB               # Mosaic internal scratch margin


def _pick_tiles(B, dim, hidden, x_itemsize, w_itemsize, out_itemsize,
                needs_scratch, budget):
    """Largest (tb, th) that divide the problem, respect (8,128) tiling, keep
    >= 2 batch tiles (v7x megacore sharding) and fit the VMEM budget.  Larger
    tb is preferred first: both weight matrices are re-streamed from HBM once
    per batch tile, so big tb is the main arithmetic-intensity lever."""
    tb_all = [c for c in (1024, 512, 256, 128, 64, 32, 16, 8) if B % c == 0] or [B]
    tb_cands = [c for c in tb_all if B // c >= 2] or tb_all
    th_cands = [c for c in (4096, 2048, 1024, 512, 256, 128) if hidden % c == 0] or [hidden]
    for tb in tb_cands:
        for th in th_cands:
            if _vmem_estimate(tb, th, dim, x_itemsize, w_itemsize,
                              out_itemsize, needs_scratch) <= budget:
                return tb, th
    # Nothing fits the budget: fall back to the smallest expressible tiles
    # (whole-`dim` blocks are required by the kernel structure).
    return tb_cands[-1], th_cands[-1]


# ----------------------------- wrapper -------------------------------------


def prepare_params(w_enc, w_dec, matmul_dtype=jnp.bfloat16):
    """One-time (per parameter set) transform: transpose the PyTorch
    (out_features, in_features) weights to MXU-native (K, N) layouts and, if
    they are f32, downcast to `matmul_dtype` for the MXU.

      w_enc: (hidden, dim)  ->  we_t: (dim, hidden)
      w_dec: (dim, hidden)  ->  wd_t: (hidden, dim)

    Do this at parameter-load time (or cache it), not per forward call.
    """
    we_t = jnp.asarray(w_enc).T
    wd_t = jnp.asarray(w_dec).T
    if matmul_dtype is not None and we_t.dtype == jnp.float32:
        we_t = we_t.astype(matmul_dtype)
        wd_t = wd_t.astype(matmul_dtype)
    return we_t, wd_t


def autoencoder_forward(x, we_t, wd_t, *, tb=None, th=None):
    """Fused autoencoder forward.

    x:    (B, dim)
    we_t: (dim, hidden)  -- W_enc^T from prepare_params
    wd_t: (hidden, dim)  -- W_dec^T from prepare_params
    Returns (x_, h, x - x_), matching the PyTorch module's forward.
    """
    B, dim = x.shape
    dim_e, hidden = we_t.shape
    assert dim_e == dim
    assert wd_t.shape == (hidden, dim)
    assert we_t.dtype == wd_t.dtype

    out_dtype = x.dtype
    out_is_f32 = jnp.dtype(out_dtype) == jnp.float32
    needs_scratch = not out_is_f32

    budget, vmem_cap = _vmem_policy()
    x_i = jnp.dtype(x.dtype).itemsize
    w_i = jnp.dtype(we_t.dtype).itemsize
    o_i = jnp.dtype(out_dtype).itemsize

    auto_tb, auto_th = _pick_tiles(B, dim, hidden, x_i, w_i, o_i,
                                   needs_scratch, budget)
    tb = auto_tb if tb is None else tb
    th = auto_th if th is None else th
    # TODO(synk): pad ragged batch / hidden sizes instead of asserting divisibility.
    assert B % tb == 0 and hidden % th == 0

    grid = (B // tb, hidden // th)

    vmem_need = _vmem_estimate(tb, th, dim, x_i, w_i, o_i, needs_scratch)
    vmem_limit = int(min(max(vmem_need + 8 * _MiB, 32 * _MiB), vmem_cap))

    cost = pl.CostEstimate(
        flops=4 * B * dim * hidden,  # two matmuls, 2*M*N*K each
        transcendentals=0,
        bytes_accessed=(x.size * x_i
                        + (B // tb) * (we_t.size + wd_t.size) * w_i
                        + (2 * B * dim + B * hidden) * o_i),
    )

    kernel = _ae_kernel_f32 if out_is_f32 else _ae_kernel_acc
    scratch = [] if out_is_f32 else [pltpu.VMEM((tb, dim), jnp.float32)]

    out_shapes = (
        jax.ShapeDtypeStruct((B, dim), out_dtype),     # x_ (reconstruction)
        jax.ShapeDtypeStruct((B, hidden), out_dtype),  # h  (code)
        jax.ShapeDtypeStruct((B, dim), out_dtype),     # x - x_ (residual)
    )

    return pl.pallas_call(
        kernel,
        out_shape=out_shapes,
        grid_spec=pltpu.PrefetchScalarGridSpec(
            num_scalar_prefetch=0,
            grid=grid,
            in_specs=[
                pl.BlockSpec((tb, dim), lambda i, k: (i, 0)),   # x (resident over k)
                pl.BlockSpec((dim, th), lambda i, k: (0, k)),   # W_enc^T block
                pl.BlockSpec((th, dim), lambda i, k: (k, 0)),   # W_dec^T block
            ],
            out_specs=[
                pl.BlockSpec((tb, dim), lambda i, k: (i, 0)),   # x_ (k-resident acc)
                pl.BlockSpec((tb, th), lambda i, k: (i, k)),    # h
                pl.BlockSpec((tb, dim), lambda i, k: (i, 0)),   # residual
            ],
            scratch_shapes=scratch,
        ),
        compiler_params=pltpu.CompilerParams(
            dimension_semantics=("parallel", "arbitrary"),
            vmem_limit_bytes=vmem_limit,
        ),
        cost_estimate=cost,
    )(x, we_t, wd_t)


# ------------------------------ checks --------------------------------------


def _check(batch, dim, hidden, key, *, th=None, tol=2e-3):
    kx, ke, kd = jax.random.split(key, 3)
    x = jax.random.normal(kx, (batch, dim), dtype=jnp.float32)
    # PyTorch nn.Linear layout: (out_features, in_features).
    bound_e = 1.0 / (dim ** 0.5)
    bound_d = 1.0 / (hidden ** 0.5)
    w_enc = jax.random.uniform(ke, (hidden, dim), jnp.float32,
                               minval=-bound_e, maxval=bound_e)
    w_dec = jax.random.uniform(kd, (dim, hidden), jnp.float32,
                               minval=-bound_d, maxval=bound_d)

    # One-time parameter transform (transpose + bf16 downcast), then fused kernel.
    we_t, wd_t = prepare_params(w_enc, w_dec, matmul_dtype=jnp.bfloat16)
    fwd = jax.jit(functools.partial(autoencoder_forward, th=th))
    x_rec, h, resid = fwd(x, we_t, wd_t)
    jax.block_until_ready((x_rec, h, resid))

    # Reference uses the same operand rounding (bf16 operands, f32 accumulation)
    # so the comparison isolates kernel correctness from the precision choice.
    xf = x.astype(jnp.bfloat16).astype(jnp.float32)
    wef = we_t.astype(jnp.float32)
    wdf = wd_t.astype(jnp.float32)
    h_ref = jnp.dot(xf, wef, precision=lax.Precision.HIGHEST)
    xr_ref = jnp.dot(h_ref.astype(jnp.bfloat16).astype(jnp.float32), wdf,
                     precision=lax.Precision.HIGHEST)

    assert jnp.allclose(h, h_ref, atol=tol, rtol=tol), "h mismatch"
    assert jnp.allclose(x_rec, xr_ref, atol=tol, rtol=tol), "x_ mismatch"
    assert jnp.allclose(resid, x - xr_ref, atol=tol, rtol=tol), "residual mismatch"


if __name__ == "__main__":
    key = jax.random.PRNGKey(0)
    k1, k2 = jax.random.split(key)
    # Tiny toy shape from the original module (single grid step, th < 128 path).
    _check(batch=8, dim=128, hidden=32, key=k1)
    # Multi-tile grid: 2 batch tiles x 4 hidden tiles -> exercises pipelining,
    # megacore sharding and the k-axis output-resident accumulator.
    _check(batch=256, dim=128, hidden=512, key=k2, th=128)
    print("KERNEL_OK")
</pallas_src>

<mosaic_0001>
module attributes {stable_mosaic.version = 11 : i64} {
  func.func @_ae_kernel_f32(%arg0: i32, %arg1: i32, %arg2: memref<8x128xf32, #tpu.memory_space<vmem>>, %arg3: memref<128x32xbf16, #tpu.memory_space<vmem>>, %arg4: memref<32x128xbf16, #tpu.memory_space<vmem>>, %arg5: memref<8x128xf32, #tpu.memory_space<vmem>>, %arg6: memref<8x32xf32, #tpu.memory_space<vmem>>, %arg7: memref<8x128xf32, #tpu.memory_space<vmem>>) attributes {dimension_semantics = [#tpu.dimension_semantics<parallel>, #tpu.dimension_semantics<arbitrary>], iteration_bounds = array<i64: 1, 1>, scalar_prefetch = 0 : i64, scratch_operands = 0 : i64, tpu.core_type = #tpu.core_type<tc>, window_params = [{transform_indices = @transform_0, window_bounds = array<i64: 8, 128>}, {transform_indices = @transform_1, window_bounds = array<i64: 128, 32>}, {transform_indices = @transform_2, window_bounds = array<i64: 32, 128>}, {transform_indices = @transform_3, window_bounds = array<i64: 8, 128>}, {transform_indices = @transform_4, window_bounds = array<i64: 8, 32>}, {transform_indices = @transform_5, window_bounds = array<i64: 8, 128>}]} {
    %c0 = arith.constant 0 : index
    %c0_0 = arith.constant 0 : index
    %0 = vector.load %arg2[%c0, %c0_0] : memref<8x128xf32, #tpu.memory_space<vmem>>, vector<8x128xf32>
    %1 = arith.truncf %0 : vector<8x128xf32> to vector<8x128xbf16>
    %c0_1 = arith.constant 0 : index
    %c0_2 = arith.constant 0 : index
    %2 = vector.load %arg3[%c0_1, %c0_2] : memref<128x32xbf16, #tpu.memory_space<vmem>>, vector<128x32xbf16>
    %cst = arith.constant dense<0.000000e+00> : vector<8x32xf32>
    %3 = tpu.matmul %1, %2, %cst {dimension_numbers = #tpu.dot_dimension_numbers<[1], [0], [0], [1], [0, 0, 1, 1], [], []>} : vector<8x128xbf16>, vector<128x32xbf16>, vector<8x32xf32> -> vector<8x32xf32>
    %c0_3 = arith.constant 0 : index
    %c0_4 = arith.constant 0 : index
    %4 = vector.load %arg6[%c0_3, %c0_4] : memref<8x32xf32, #tpu.memory_space<vmem>>, vector<8x32xf32>
    tpu.vector_store %arg6[%c0_3, %c0_4], %3 {strides = array<i32>} : memref<8x32xf32, #tpu.memory_space<vmem>>, vector<8x32xf32>,
    %5 = arith.truncf %3 : vector<8x32xf32> to vector<8x32xbf16>
    %c0_5 = arith.constant 0 : index
    %c0_6 = arith.constant 0 : index
    %6 = vector.load %arg4[%c0_5, %c0_6] : memref<32x128xbf16, #tpu.memory_space<vmem>>, vector<32x128xbf16>
    %cst_7 = arith.constant dense<0.000000e+00> : vector<8x128xf32>
    %7 = tpu.matmul %5, %6, %cst_7 {dimension_numbers = #tpu.dot_dimension_numbers<[1], [0], [0], [1], [0, 0, 1, 1], [], []>} : vector<8x32xbf16>, vector<32x128xbf16>, vector<8x128xf32> -> vector<8x128xf32>
    %c0_i32 = arith.constant 0 : i32
    %8 = arith.cmpi eq, %arg1, %c0_i32 : i32
    %9 = arith.extui %8 : i1 to i32
    %c0_i32_8 = arith.constant 0 : i32
    %10 = arith.cmpi ne, %9, %c0_i32_8 : i32
    scf.if %10 {
      %c0_13 = arith.constant 0 : index
      %c0_14 = arith.constant 0 : index
      %17 = vector.load %arg5[%c0_13, %c0_14] : memref<8x128xf32, #tpu.memory_space<vmem>>, vector<8x128xf32>
      tpu.vector_store %arg5[%c0_13, %c0_14], %7 {strides = array<i32>} : memref<8x128xf32, #tpu.memory_space<vmem>>, vector<8x128xf32>,
    } else {
    }
    %c0_i32_9 = arith.constant 0 : i32
    %11 = arith.cmpi ne, %arg1, %c0_i32_9 : i32
    %12 = arith.extui %11 : i1 to i32
    %c0_i32_10 = arith.constant 0 : i32
    %13 = arith.cmpi ne, %12, %c0_i32_10 : i32
    scf.if %13 {
      %c0_13 = arith.constant 0 : index
      %c0_14 = arith.constant 0 : index
      %17 = vector.load %arg5[%c0_13, %c0_14] : memref<8x128xf32, #tpu.memory_space<vmem>>, vector<8x128xf32>
      %18 = arith.addf %17, %7 : vector<8x128xf32>
      %c0_15 = arith.constant 0 : index
      %c0_16 = arith.constant 0 : index
      %19 = vector.load %arg5[%c0_15, %c0_16] : memref<8x128xf32, #tpu.memory_space<vmem>>, vector<8x128xf32>
      tpu.vector_store %arg5[%c0_15, %c0_16], %18 {strides = array<i32>} : memref<8x128xf32, #tpu.memory_space<vmem>>, vector<8x128xf32>,
    } else {
    }
    %c0_i32_11 = arith.constant 0 : i32
    %14 = arith.cmpi eq, %arg1, %c0_i32_11 : i32
    %15 = arith.extui %14 : i1 to i32
    %c0_i32_12 = arith.constant 0 : i32
    %16 = arith.cmpi ne, %15, %c0_i32_12 : i32
    scf.if %16 {
      %c0_13 = arith.constant 0 : index
      %c0_14 = arith.constant 0 : index
      %17 = vector.load %arg5[%c0_13, %c0_14] : memref<8x128xf32, #tpu.memory_space<vmem>>, vector<8x128xf32>
      %18 = arith.subf %0, %17 : vector<8x128xf32>
      %c0_15 = arith.constant 0 : index
      %c0_16 = arith.constant 0 : index
      %19 = vector.load %arg7[%c0_15, %c0_16] : memref<8x128xf32, #tpu.memory_space<vmem>>, vector<8x128xf32>
      tpu.vector_store %arg7[%c0_15, %c0_16], %18 {strides = array<i32>} : memref<8x128xf32, #tpu.memory_space<vmem>>, vector<8x128xf32>,
    } else {
    }
    return
  }
  func.func @transform_0(%arg0: i32, %arg1: i32) -> (i32, i32) {
    %c0_i32 = arith.constant 0 : i32
    %c0_i32_0 = arith.constant 0 : i32
    return %arg0, %c0_i32 : i32, i32
  }
  func.func @transform_1(%arg0: i32, %arg1: i32) -> (i32, i32) {
    %c0_i32 = arith.constant 0 : i32
    %c0_i32_0 = arith.constant 0 : i32
    return %c0_i32, %arg1 : i32, i32
  }
  func.func @transform_2(%arg0: i32, %arg1: i32) -> (i32, i32) {
    %c0_i32 = arith.constant 0 : i32
    %c0_i32_0 = arith.constant 0 : i32
    return %arg1, %c0_i32 : i32, i32
  }
  func.func @transform_3(%arg0: i32, %arg1: i32) -> (i32, i32) {
    %c0_i32 = arith.constant 0 : i32
    %c0_i32_0 = arith.constant 0 : i32
    return %arg0, %c0_i32 : i32, i32
  }
  func.func @transform_4(%arg0: i32, %arg1: i32) -> (i32, i32) {
    %c0_i32 = arith.constant 0 : i32
    return %arg0, %arg1 : i32, i32
  }
  func.func @transform_5(%arg0: i32, %arg1: i32) -> (i32, i32) {
    %c0_i32 = arith.constant 0 : i32
    %c0_i32_0 = arith.constant 0 : i32
    return %arg0, %c0_i32 : i32, i32
  }
}

</mosaic_0001>

<llo_original>
// kernel: autoencoder_forward.1
$region0: #{autoencoder_forward.1}
  #allocation0 [shape = 'u32[]', space=smem, size = 0x4, offset = 0x4, fixed_abs, tag = 'smem constant byte address 0x4 - core index']
  #allocation1 [shape = 'u32[144,128]{1,0:T(1,128)}', space=vmem, size = 0x12000, scoped, tag = 'internal scratch']
  %s0 = inlined_call_operand.vmem [shape: f32[8,128], index: 0, kind: input, shape index: {}]
  %s1 = inlined_call_operand.vmem [shape: bf16[128,32], index: 1, kind: input, shape index: {}]
  %s2 = inlined_call_operand.vmem [shape: bf16[32,128], index: 2, kind: input, shape index: {}]
  %s3 = inlined_call_operand.hbm [shape: f32[8,128], index: 3, kind: output, shape index: {0}]
  %s4 = inlined_call_operand.hbm [shape: f32[8,32], index: 4, kind: output, shape index: {1}]
  %s5 = inlined_call_operand.hbm [shape: f32[8,128], index: 5, kind: output, shape index: {2}]
  %6 = xla_tuple %s3, %s4, %s5
  %s7 = sld [smem:[#allocation0]]
  $region50: #{autoencoder_forward.1} parent=0
    _
  %s9 = ssub.s32 1, %s7
  %s10 = scalar_select 0, %s9, %s7
  $region1: #{autoencoder_forward.1} parent=0
    #allocation2 [shape = 'u8[4096]{0}', space=vmem, size = 0x1000, scoped, tag = 'output window, operand 0, single buffered']
    #allocation3 [shape = 's32[1]{0}', space=sflag, size = 0x4, scoped, tag = 'scoped memory for autoencoder_forward.1']
    #allocation4 [shape = 'u8[4096]{0}', space=vmem, size = 0x1000, scoped, tag = 'output window, operand 1, single buffered']
    #allocation5 [shape = 's32[1]{0}', space=sflag, size = 0x4, scoped, tag = 'scoped memory for autoencoder_forward.1']
    #allocation6 [shape = 'u8[4096]{0}', space=vmem, size = 0x1000, scoped, tag = 'output window, operand 2, single buffered']
    %11 = vsyncpa [#allocation3], 0
    %12 = vsyncpa [#allocation5], 0
    // Predicated region
    $region2: #{autoencoder_forward.1} parent=1 // pred_check
      _
    $region3: #{autoencoder_forward.1} parent=1 // pred_check_branch
      %14 = sbr.rel (0) target = $region5
    $region4: #{autoencoder_forward.1} parent=1 // pred_region
      _
    $region5: #{autoencoder_forward.1} parent=1 // pred_fallthru
      _
    // Predicated region
    $region6: #{autoencoder_forward.1} parent=1 // pred_check
      _
    $region7: #{autoencoder_forward.1} parent=1 // pred_check_branch
      %16 = sbr.rel (0) target = $region9
    $region8: #{autoencoder_forward.1} parent=1 // pred_region
      _
    $region9: #{autoencoder_forward.1} parent=1 // pred_fallthru
      _
    // Predicated region
    $region10: #{autoencoder_forward.1} parent=1 // pred_check
      _
    $region11: #{autoencoder_forward.1} parent=1 // pred_check_branch
      %18 = sbr.rel (0) target = $region13
    $region12: #{autoencoder_forward.1} parent=1 // pred_region
      _
    $region13: #{autoencoder_forward.1} parent=1 // pred_fallthru
      _
    %v20 = vld [vmem:[%s0] sm:$0xff]
    %v21 = vpack.c.bf16 %v20, %v20
    %v22 = vld [vmem:[%s1] sm:$0xf]
    %v23 = vld [vmem:[%s1 + $0x4] sm:$0xf]
    %v24 = vld [vmem:[%s1 + $0x8] sm:$0xf]
    %v25 = vld [vmem:[%s1 + $0xc] sm:$0xf]
    %v26 = vld [vmem:[%s1 + $0x10] sm:$0xf]
    %v27 = vld [vmem:[%s1 + $0x14] sm:$0xf]
    %v28 = vld [vmem:[%s1 + $0x18] sm:$0xf]
    %v29 = vld [vmem:[%s1 + $0x1c] sm:$0xf]
    %v30 = vld [vmem:[%s1 + $0x20] sm:$0xf]
    %v31 = vld [vmem:[%s1 + $0x24] sm:$0xf]
    %v32 = vld [vmem:[%s1 + $0x28] sm:$0xf]
    %v33 = vld [vmem:[%s1 + $0x2c] sm:$0xf]
    %v34 = vld [vmem:[%s1 + $0x30] sm:$0xf]
    %v35 = vld [vmem:[%s1 + $0x34] sm:$0xf]
    %v36 = vld [vmem:[%s1 + $0x38] sm:$0xf]
    %v37 = vld [vmem:[%s1 + $0x3c] sm:$0xf]
    %v54 = vunpack.c.l.b16 %v22
    %v55 = vunpack.c.l.b16 %v23
    %v56 = vunpack.c.l.b16 %v24
    %v57 = vunpack.c.l.b16 %v25
    %v58 = vunpack.c.l.b16 %v26
    %v59 = vunpack.c.l.b16 %v27
    %v60 = vunpack.c.l.b16 %v28
    %v61 = vunpack.c.l.b16 %v29
    %v62 = vunpack.c.l.b16 %v30
    %v63 = vunpack.c.l.b16 %v31
    %v64 = vunpack.c.l.b16 %v32
    %v65 = vunpack.c.l.b16 %v33
    %v66 = vunpack.c.l.b16 %v34
    %v67 = vunpack.c.l.b16 %v35
    %v68 = vunpack.c.l.b16 %v36
    %v69 = vunpack.c.l.b16 %v37
    %v70 = vpack.c.b16 %v55, %v54
    %v71 = vpack.c.b16 %v57, %v56
    %v72 = vpack.c.b16 %v59, %v58
    %v73 = vpack.c.b16 %v61, %v60
    %v74 = vpack.c.b16 %v63, %v62
    %v75 = vpack.c.b16 %v65, %v64
    %v76 = vpack.c.b16 %v67, %v66
    %v77 = vpack.c.b16 %v69, %v68
    %86 = vmatprep.subr.bf16.mxu0 0
    %87 = vmatpush1.bf16.msra.mxu0 %v77
    %88 = vmatprep.subr.bf16.mxu0 0
    %89 = vmatpush1.bf16.msra.mxu0 %v76
    %90 = vmatprep.subr.bf16.mxu0 0
    %91 = vmatpush1.bf16.msra.mxu0 %v75
    %92 = vmatprep.subr.bf16.mxu0 0
    %93 = vmatpush1.bf16.msra.mxu0 %v74
    %94 = vmatprep.subr.bf16.mxu0 0
    %95 = vmatpush1.bf16.msra.mxu0 %v73
    %96 = vmatprep.subr.bf16.mxu0 0
    %97 = vmatpush1.bf16.msra.mxu0 %v72
    %98 = vmatprep.subr.bf16.mxu0 0
    %99 = vmatpush1.bf16.msra.mxu0 %v71
    %100 = vmatprep.subr.bf16.mxu0 0
    %101 = vmatpush1.bf16.msra.mxu0 %v70
    %102 = vmatprep.subr.bf16.mxu0 0
    %103 = vmatpush2.bf16.msra.mxu0 0
    %104 = vmatprep.subr.bf16.mxu0 0
    %105 = vmatpush2.bf16.msra.mxu0 0
    %106 = vmatprep.subr.bf16.mxu0 0
    %107 = vmatpush2.bf16.msra.mxu0 0
    %108 = vmatprep.subr.bf16.mxu0 0
    %109 = vmatpush2.bf16.msra.mxu0 0
    %110 = vmatprep.subr.bf16.mxu0 0
    %111 = vmatpush2.bf16.msra.mxu0 0
    %112 = vmatprep.subr.bf16.mxu0 0
    %113 = vmatpush2.bf16.msra.mxu0 0
    %114 = vmatprep.subr.bf16.mxu0 0
    %115 = vmatpush2.bf16.msra.mxu0 0
    %116 = vmatprep.subr.bf16.mxu0 0
    %117 = vmatpush2.bf16.msra.mxu0 0
    %118 = vmatprep.mubr.bf16.mxu0 0
    %119 = vmatmul.mubr.bf16.gmra.mxu0 %v21
    %v120 = vpop.f32.mrf.mxu0
    %v121 = vadd.f32 0.0, %v120
    %v122 = vpop.f32.mrf.mxu0
    %v123 = vpop.f32.mrf.mxu0
    %v124 = vpop.f32.mrf.mxu0
    %125 = vdwg.mxu0
    %vm126 = vcmask 261120
    %127 = vst.msk [vmem:[#allocation4] sm:$0xff] %vm126, %v121
    %v128 = vpack.c.bf16 %v121, %v121
    %v129 = vld [vmem:[%s2] sm:$0xf]
    %v130 = vld [vmem:[%s2 + $0x4] sm:$0xf]
    %v131 = vld [vmem:[%s2 + $0x8] sm:$0xf]
    %v132 = vld [vmem:[%s2 + $0xc] sm:$0xf]
    %v137 = vunpack.c.l.b16 %v129
    %v138 = vunpack.c.l.b16 %v130
    %v139 = vunpack.c.l.b16 %v131
    %v140 = vunpack.c.l.b16 %v132
    %v141 = vpack.c.b16 %v138, %v137
    %v142 = vpack.c.b16 %v140, %v139
    %v146 = vsel %vm126, %v128, 0
    %148 = vmatprep.subr.bf16.mxu0 0
    %149 = vmatpush1.bf16.msra.mxu0 0
    %150 = vmatprep.subr.bf16.mxu0 0
    %151 = vmatpush1.bf16.msra.mxu0 0
    %152 = vmatprep.subr.bf16.mxu0 0
    %153 = vmatpush1.bf16.msra.mxu0 0
    %154 = vmatprep.subr.bf16.mxu0 0
    %155 = vmatpush1.bf16.msra.mxu0 0
    %156 = vmatprep.subr.bf16.mxu0 0
    %157 = vmatpush1.bf16.msra.mxu0 0
    %158 = vmatprep.subr.bf16.mxu0 0
    %159 = vmatpush1.bf16.msra.mxu0 0
    %160 = vmatprep.subr.bf16.mxu0 0
    %161 = vmatpush1.bf16.msra.mxu0 %v142
    %162 = vmatprep.subr.bf16.mxu0 0
    %163 = vmatpush1.bf16.msra.mxu0 %v141
    %164 = vmatprep.subr.bf16.mxu0 0
    %165 = vmatpush2.bf16.msra.mxu0 0
    %166 = vmatprep.subr.bf16.mxu0 0
    %167 = vmatpush2.bf16.msra.mxu0 0
    %168 = vmatprep.subr.bf16.mxu0 0
    %169 = vmatpush2.bf16.msra.mxu0 0
    %170 = vmatprep.subr.bf16.mxu0 0
    %171 = vmatpush2.bf16.msra.mxu0 0
    %172 = vmatprep.subr.bf16.mxu0 0
    %173 = vmatpush2.bf16.msra.mxu0 0
    %174 = vmatprep.subr.bf16.mxu0 0
    %175 = vmatpush2.bf16.msra.mxu0 0
    %176 = vmatprep.subr.bf16.mxu0 0
    %177 = vmatpush2.bf16.msra.mxu0 0
    %178 = vmatprep.subr.bf16.mxu0 0
    %179 = vmatpush2.bf16.msra.mxu0 0
    %180 = vmatprep.mubr.bf16.mxu0 0
    %181 = vmatmul.mubr.bf16.gmra.mxu0 %v146
    %v182 = vpop.f32.mrf.mxu0
    %v183 = vadd.f32 0.0, %v182
    %v184 = vpop.f32.mrf.mxu0
    %v185 = vpop.f32.mrf.mxu0
    %v186 = vpop.f32.mrf.mxu0
    %187 = vdwg.mxu0
    %p188 = scmp.eq.s32.totalorder 0, 0
    // Predicated region
    $region14: #{autoencoder_forward.1} parent=1 // pred_check
      %p189 = pneg %p188
    $region15: #{autoencoder_forward.1} parent=1 // pred_check_branch
      %191 = sbr.rel (%p189) target = $region17
    $region16: #{autoencoder_forward.1} parent=1 // pred_region
      %192 = vst [vmem:[#allocation2] sm:$0xff] %v183
    $region17: #{autoencoder_forward.1} parent=1 // pred_fallthru
      _
    %p193 = scmp.ne.s32.totalorder 0, 0
    // Predicated region
    $region18: #{autoencoder_forward.1} parent=1 // pred_check
      %p194 = pneg %p193
    $region19: #{autoencoder_forward.1} parent=1 // pred_check_branch
      %196 = sbr.rel (%p194) target = $region21
    $region20: #{autoencoder_forward.1} parent=1 // pred_region
      %v197 = vld [vmem:[#allocation2] sm:$0xff]
      %v198 = vadd.f32 %v197, %v183
      %199 = vst [vmem:[#allocation2] sm:$0xff] %v198
    $region21: #{autoencoder_forward.1} parent=1 // pred_fallthru
      _
    // Predicated region
    $region22: #{autoencoder_forward.1} parent=1 // pred_check
      %p200 = pneg %p188
    $region23: #{autoencoder_forward.1} parent=1 // pred_check_branch
      %202 = sbr.rel (%p200) target = $region25
    $region24: #{autoencoder_forward.1} parent=1 // pred_region
      %v203 = vld [vmem:[#allocation2] sm:$0xff]
      %v204 = vsub.f32 %v20, %v203
      %205 = vst [vmem:[#allocation6] sm:$0xff] %v204
    $region25: #{autoencoder_forward.1} parent=1 // pred_fallthru
      _
    // Predicated region
    $region26: #{autoencoder_forward.1} parent=1 // pred_check
      _
    $region27: #{autoencoder_forward.1} parent=1 // pred_check_branch
      %207 = sbr.rel (0) target = $region29
    $region28: #{autoencoder_forward.1} parent=1 // pred_region
      %s209 = ssub.s32 128, 128
      %210 = vsyncadd [#allocation3], %s209
      %s212 = sshll.u32 [#allocation2], 4
      %s213 = int_to_ptr.vmem [resolvable:$true] %s212
      %215 = dma.vmem_to_hbm [thread:$0]  %s213, 128, %s3, [#allocation3]
    $region29: #{autoencoder_forward.1} parent=1 // pred_fallthru
      _
    // Predicated region
    $region30: #{autoencoder_forward.1} parent=1 // pred_check
      _
    $region31: #{autoencoder_forward.1} parent=1 // pred_check_branch
      %217 = sbr.rel (0) target = $region33
    $region32: #{autoencoder_forward.1} parent=1 // pred_region
      %s219 = ssub.s32 128, 128
      %220 = vsyncadd [#allocation5], %s219
      %s222 = sshll.u32 [#allocation4], 4
      %s223 = int_to_ptr.vmem [resolvable:$true] %s222
      %225 = dma.vmem_to_hbm [thread:$0]  %s223, 128, %s4, [#allocation5]
    $region33: #{autoencoder_forward.1} parent=1 // pred_fallthru
      _
    // Predicated region
    $region34: #{autoencoder_forward.1} parent=1 // pred_check
      _
    $region35: #{autoencoder_forward.1} parent=1 // pred_check_branch
      %227 = sbr.rel (0) target = $region37
    $region36: #{autoencoder_forward.1} parent=1 // pred_region
      %s229 = ssub.s32 128, 128
      %230 = vsyncadd [#allocation5], %s229
      %s232 = sshll.u32 [#allocation6], 4
      %s233 = int_to_ptr.vmem [resolvable:$true] %s232
      %235 = dma.vmem_to_hbm [thread:$0]  %s233, 128, %s5, [#allocation5]
    $region37: #{autoencoder_forward.1} parent=1 // pred_fallthru
      _
    // Predicated region
    $region38: #{autoencoder_forward.1} parent=1 // pred_check
      _
    $region39: #{autoencoder_forward.1} parent=1 // pred_check_branch
      %237 = sbr.rel (0) target = $region41
    $region40: #{autoencoder_forward.1} parent=1 // pred_region
      %238 = dma.done [#allocation3], 128
    $region41: #{autoencoder_forward.1} parent=1 // pred_fallthru
      _
    // Predicated region
    $region42: #{autoencoder_forward.1} parent=1 // pred_check
      _
    $region43: #{autoencoder_forward.1} parent=1 // pred_check_branch
      %240 = sbr.rel (0) target = $region45
    $region44: #{autoencoder_forward.1} parent=1 // pred_region
      %241 = dma.done [#allocation5], 128
    $region45: #{autoencoder_forward.1} parent=1 // pred_fallthru
      _
    // Predicated region
    $region46: #{autoencoder_forward.1} parent=1 // pred_check
      _
    $region47: #{autoencoder_forward.1} parent=1 // pred_check_branch
      %243 = sbr.rel (0) target = $region49
    $region48: #{autoencoder_forward.1} parent=1 // pred_region
      %244 = dma.done [#allocation5], 128
    $region49: #{autoencoder_forward.1} parent=1 // pred_fallthru
      _
    %245 = vsyncpa [#allocation3], 1
    %246 = vsyncpa [#allocation5], 1

</llo_original>
